<compile_context>
chip_gen: v7x
topology: tpu7x:2x2x1
jax: 0.10.0
libtpu: 0.0.40
codegen_flags: <defaults>
</compile_context>

<pallas_src>
import jax
import jax.numpy as jnp
from jax.experimental import pallas as pl
from jax.experimental.pallas import tpu as pltpu


LANE = 128


def conv_bn_relu_kernel(x_ref, w_ref, scale_ref, shift_ref, o_ref):
    # x_ref:     (TM, K_pad)      bf16  im2col patch rows
    # w_ref:     (K_pad, CO_pad)  bf16  folded conv weights
    # scale_ref: (1, CO_pad)      f32   BN scale  = gamma / sqrt(var+eps)
    # shift_ref: (1, CO_pad)      f32   BN shift  = scale*(bias-mean)+beta
    # o_ref:     (TM, CO_pad)     f32   output rows (lane dense)
    acc = jnp.dot(x_ref[...], w_ref[...], preferred_element_type=jnp.float32)
    out = acc * scale_ref[...] + shift_ref[...]          # folded BN affine
    o_ref[...] = jnp.maximum(out, 0.0)                   # ReLU


def _round_up(x, m):
    return ((x + m - 1) // m) * m


def basic3x3_forward(x_nchw, w_oihw, conv_bias, gamma, beta,
                     running_mean, running_var, eps=1e-5, tile_rows=256):
    N, Cin, H, W = x_nchw.shape
    Cout = w_oihw.shape[0]
    K = 9 * Cin

    # ---- glue (plain JAX, fused by XLA): layout + im2col + BN folding ----
    x_nhwc = jnp.transpose(x_nchw, (0, 2, 3, 1))                  # (N,H,W,Cin)
    x_pad = jnp.pad(x_nhwc, ((0, 0), (1, 1), (1, 1), (0, 0)))
    patches = [x_pad[:, dy:dy + H, dx:dx + W, :]
               for dy in range(3) for dx in range(3)]
    x_col = jnp.concatenate(patches, axis=-1).reshape(N * H * W, K)

    rows = N * H * W
    TM = min(tile_rows, _round_up(rows, 16))     # bf16 sublane multiple
    rows_pad = _round_up(rows, TM)
    K_pad = _round_up(K, LANE)
    CO_pad = _round_up(Cout, LANE)

    x_col = jnp.pad(x_col, ((0, rows_pad - rows), (0, K_pad - K)))
    x_col = x_col.astype(jnp.bfloat16)

    w_col = jnp.transpose(w_oihw, (2, 3, 1, 0)).reshape(K, Cout)  # (9*Cin,Cout)
    w_col = jnp.pad(w_col, ((0, K_pad - K), (0, CO_pad - Cout)))
    w_col = w_col.astype(jnp.bfloat16)

    scale = gamma / jnp.sqrt(running_var + eps)
    shift = scale * (conv_bias - running_mean) + beta
    scale = jnp.pad(scale, (0, CO_pad - Cout)).reshape(1, CO_pad).astype(jnp.float32)
    shift = jnp.pad(shift, (0, CO_pad - Cout)).reshape(1, CO_pad).astype(jnp.float32)

    grid = (rows_pad // TM,)
    out_flat = pl.pallas_call(
        conv_bn_relu_kernel,
        out_shape=jax.ShapeDtypeStruct((rows_pad, CO_pad), jnp.float32),
        grid_spec=pltpu.PrefetchScalarGridSpec(
            num_scalar_prefetch=0,
            grid=grid,
            in_specs=[
                pl.BlockSpec((TM, K_pad), lambda r: (r, 0)),
                pl.BlockSpec((K_pad, CO_pad), lambda r: (0, 0)),
                pl.BlockSpec((1, CO_pad), lambda r: (0, 0)),
                pl.BlockSpec((1, CO_pad), lambda r: (0, 0)),
            ],
            out_specs=pl.BlockSpec((TM, CO_pad), lambda r: (r, 0)),
        ),
        compiler_params=pltpu.CompilerParams(
            dimension_semantics=("parallel",)),
    )(x_col, w_col, scale, shift)

    # Slice off lane/row padding and return to PyTorch NCHW layout.
    # (If the surrounding model consumed NHWC, this transpose could be dropped.)
    out = out_flat[:rows, :Cout].reshape(N, H, W, Cout)
    return jnp.transpose(out, (0, 3, 1, 2))


if __name__ == "__main__":
    key = jax.random.PRNGKey(0)
    k1, k2, k3, k4 = jax.random.split(key, 4)

    # Shapes from MODEL: convInput = Basic3x3(in_channel=2, out_channel=16).
    N, Cin, Cout, H, W = 2, 2, 16, 16, 16

    x = jax.random.normal(k1, (N, Cin, H, W), jnp.float32)
    conv_w = jax.random.normal(k2, (Cout, Cin, 3, 3), jnp.float32) * 0.1
    conv_b = jax.random.normal(k3, (Cout,), jnp.float32) * 0.1
    bn_gamma = 1.0 + 0.1 * jnp.arange(Cout, dtype=jnp.float32)
    bn_beta = jax.random.normal(k4, (Cout,), jnp.float32) * 0.1
    bn_mean = jnp.zeros((Cout,), jnp.float32)   # BatchNorm2d init running_mean
    bn_var = jnp.ones((Cout,), jnp.float32)     # BatchNorm2d init running_var

    out = basic3x3_forward(x, conv_w, conv_b, bn_gamma, bn_beta,
                           bn_mean, bn_var)
    out = jax.block_until_ready(out)

    # Pure-JAX reference at matched precision (bf16 inputs, f32 accumulation).
    x_nhwc = jnp.transpose(x, (0, 2, 3, 1)).astype(jnp.bfloat16)
    w_hwio = jnp.transpose(conv_w, (2, 3, 1, 0)).astype(jnp.bfloat16)
    conv_ref = jax.lax.conv_general_dilated(
        x_nhwc, w_hwio, (1, 1), "SAME",
        dimension_numbers=("NHWC", "HWIO", "NHWC"),
        preferred_element_type=jnp.float32) + conv_b
    scale = bn_gamma / jnp.sqrt(bn_var + 1e-5)
    ref = jnp.maximum(conv_ref * scale + (bn_beta - bn_mean * scale), 0.0)
    ref = jnp.transpose(ref, (0, 3, 1, 2))

    assert out.shape == (N, Cout, H, W)
    err = float(jnp.max(jnp.abs(out - ref)))
    assert jnp.allclose(out, ref, atol=2e-3, rtol=2e-3), err
    print("KERNEL_OK")
</pallas_src>

<mosaic_0001>
module attributes {stable_mosaic.version = 11 : i64} {
  func.func @conv_bn_relu_kernel(%arg0: i32, %arg1: memref<256x128xbf16, #tpu.memory_space<vmem>>, %arg2: memref<128x128xbf16, #tpu.memory_space<vmem>>, %arg3: memref<1x128xf32, #tpu.memory_space<vmem>>, %arg4: memref<1x128xf32, #tpu.memory_space<vmem>>, %arg5: memref<256x128xf32, #tpu.memory_space<vmem>>) attributes {dimension_semantics = [#tpu.dimension_semantics<parallel>], iteration_bounds = array<i64: 2>, scalar_prefetch = 0 : i64, scratch_operands = 0 : i64, tpu.core_type = #tpu.core_type<tc>, window_params = [{transform_indices = @transform_0, window_bounds = array<i64: 256, 128>}, {pipeline_mode = #tpu.pipeline_mode<synchronous>, transform_indices = @transform_1, window_bounds = array<i64: 128, 128>}, {pipeline_mode = #tpu.pipeline_mode<synchronous>, transform_indices = @transform_2, window_bounds = array<i64: 1, 128>}, {pipeline_mode = #tpu.pipeline_mode<synchronous>, transform_indices = @transform_3, window_bounds = array<i64: 1, 128>}, {transform_indices = @transform_4, window_bounds = array<i64: 256, 128>}]} {
    %c0 = arith.constant 0 : index
    %c0_0 = arith.constant 0 : index
    %0 = vector.load %arg1[%c0, %c0_0] : memref<256x128xbf16, #tpu.memory_space<vmem>>, vector<256x128xbf16>
    %c0_1 = arith.constant 0 : index
    %c0_2 = arith.constant 0 : index
    %1 = vector.load %arg2[%c0_1, %c0_2] : memref<128x128xbf16, #tpu.memory_space<vmem>>, vector<128x128xbf16>
    %cst = arith.constant dense<0.000000e+00> : vector<256x128xf32>
    %2 = tpu.matmul %0, %1, %cst {dimension_numbers = #tpu.dot_dimension_numbers<[1], [0], [0], [1], [0, 0, 1, 1], [], []>} : vector<256x128xbf16>, vector<128x128xbf16>, vector<256x128xf32> -> vector<256x128xf32>
    %c0_3 = arith.constant 0 : index
    %c0_4 = arith.constant 0 : index
    %3 = vector.load %arg3[%c0_3, %c0_4] : memref<1x128xf32, #tpu.memory_space<vmem>>, vector<1x128xf32>
    %4 = vector.broadcast %3 : vector<1x128xf32> to vector<256x128xf32>
    %5 = arith.mulf %2, %4 : vector<256x128xf32>
    %c0_5 = arith.constant 0 : index
    %c0_6 = arith.constant 0 : index
    %6 = vector.load %arg4[%c0_5, %c0_6] : memref<1x128xf32, #tpu.memory_space<vmem>>, vector<1x128xf32>
    %7 = vector.broadcast %6 : vector<1x128xf32> to vector<256x128xf32>
    %8 = arith.addf %5, %7 : vector<256x128xf32>
    %cst_7 = arith.constant 0.000000e+00 : f32
    %9 = vector.broadcast %cst_7 : f32 to vector<256x128xf32>
    %10 = arith.maximumf %8, %9 : vector<256x128xf32>
    %c0_8 = arith.constant 0 : index
    %c0_9 = arith.constant 0 : index
    %11 = vector.load %arg5[%c0_8, %c0_9] : memref<256x128xf32, #tpu.memory_space<vmem>>, vector<256x128xf32>
    tpu.vector_store %arg5[%c0_8, %c0_9], %10 {strides = array<i32>} : memref<256x128xf32, #tpu.memory_space<vmem>>, vector<256x128xf32>,
    return
  }
  func.func @transform_0(%arg0: i32) -> (i32, i32) {
    %c0_i32 = arith.constant 0 : i32
    %c0_i32_0 = arith.constant 0 : i32
    return %arg0, %c0_i32 : i32, i32
  }
  func.func @transform_1(%arg0: i32) -> (i32, i32) {
    %c0_i32 = arith.constant 0 : i32
    %c0_i32_0 = arith.constant 0 : i32
    %c0_i32_1 = arith.constant 0 : i32
    return %c0_i32, %c0_i32_0 : i32, i32
  }
  func.func @transform_2(%arg0: i32) -> (i32, i32) {
    %c0_i32 = arith.constant 0 : i32
    %c0_i32_0 = arith.constant 0 : i32
    %c0_i32_1 = arith.constant 0 : i32
    return %c0_i32, %c0_i32_0 : i32, i32
  }
  func.func @transform_3(%arg0: i32) -> (i32, i32) {
    %c0_i32 = arith.constant 0 : i32
    %c0_i32_0 = arith.constant 0 : i32
    %c0_i32_1 = arith.constant 0 : i32
    return %c0_i32, %c0_i32_0 : i32, i32
  }
  func.func @transform_4(%arg0: i32) -> (i32, i32) {
    %c0_i32 = arith.constant 0 : i32
    %c0_i32_0 = arith.constant 0 : i32
    return %arg0, %c0_i32 : i32, i32
  }
}

</mosaic_0001>

<llo_original>
// kernel: tpu_custom_call.1
$region0: #{tpu_custom_call.1}
  #allocation0 [shape = 'u32[]', space=smem, size = 0x4, offset = 0x4, fixed_abs, tag = 'smem constant byte address 0x4 - core index']
  #allocation1 [shape = 'u32[144,128]{1,0:T(1,128)}', space=vmem, size = 0x12000, scoped, tag = 'internal scratch']
  %s0 = inlined_call_operand.hbm [shape: bf16[512,128], index: 0, kind: input, shape index: {}]
  %s1 = inlined_call_operand.hbm [shape: bf16[128,128], index: 1, kind: input, shape index: {}]
  %s2 = inlined_call_operand.vmem [shape: f32[1,128], index: 2, kind: input, shape index: {}]
  %s3 = inlined_call_operand.vmem [shape: f32[1,128], index: 3, kind: input, shape index: {}]
  %s4 = inlined_call_operand.hbm [shape: f32[512,128], index: 4, kind: output, shape index: {}]
  %s5 = sld [smem:[#allocation0]]
  $region57: #{tpu_custom_call.1} parent=0
    _
  %s7 = ssub.s32 1, %s5
  %s8 = scalar_select 0, %s7, %s5
  $region1: #{tpu_custom_call.1} parent=0
    #allocation2 [shape = 'u8[131072]{0}', space=vmem, size = 0x20000, scoped, tag = 'input window, operand 0']
    #allocation3 [shape = 's32[2]{0}', space=sflag, size = 0x8, scoped, tag = 'scoped memory for tpu_custom_call.1']
    #allocation4 [shape = 's32[2]{0}', space=sflag, size = 0x8, scoped, tag = 'scoped memory for tpu_custom_call.1']
    #allocation5 [shape = 'u8[32768]{0}', space=vmem, size = 0x8000, scoped, tag = 'input window, operand 1, single buffered']
    #allocation6 [shape = 's32[1]{0}', space=sflag, size = 0x4, scoped, tag = 'scoped memory for tpu_custom_call.1']
    #allocation7 [shape = 'u8[262144]{0}', space=vmem, size = 0x40000, scoped, tag = 'output window, operand 0']
    %9 = vsyncpa [#allocation3], 0
    %s10 = scalar_lea.sflag [#allocation3], 1
    %11 = vsyncpa %s10, 0
    %12 = vsyncpa [#allocation6], 0
    %13 = vsyncpa [#allocation4], 0
    %s14 = scalar_lea.sflag [#allocation4], 1
    %15 = vsyncpa %s14, 0
    loop: start=0, step=1, limit=4
    $region2: #{tpu_custom_call.1} parent=1 // loop_pre_header
      _
    $region3: #{tpu_custom_call.1} parent=1 // loop_header
      %s17 = sphi 0, %s21
      %p18 = scmp.ge.s32.totalorder %s17, 4
      %s27 = sphi 0, %s29
      %s30 = sphi 0, %s27
      %s31 = sphi 0, %s30
      %s47 = sphi 0, %s31
      %s51 = sphi 0, %s51
      %s53 = sphi 0, %s51
      %s54 = sphi 0, %s53
      %s68 = sphi 0, %s54
      %s72 = sphi 0, %s72
      %s74 = sphi 0, %s72
      %s75 = sphi 0, %s74
      %s89 = sphi 0, %s75
      %s93 = sphi 0, %s93
      %s95 = sphi 0, %s93
      %s96 = sphi 0, %s95
      %s110 = sphi 0, %s96
      %s116 = sphi 0, %s118
      %s119 = sphi 0, %s116
      %s120 = sphi 0, %s119
      %s136 = sphi 0, %s120
    $region4: #{tpu_custom_call.1} parent=1 // loop_header_branch
      %20 = sbr.rel (%p18) target = $region8
    $region5: #{tpu_custom_call.1} parent=1 // loop_body
      %s22 = ssub.s32 %s17, 1
      %s23 = ssub.s32 %s17, 2
      %s24 = sadd.s32 %s17, 1
      %s25 = ssub.s32 %s17, %s24
      %p26 = scmp.eq.s32.totalorder %s25, 0
      %s28 = sadd.s32 %s27, 1
      %s29 = scalar_select %p26, %s27, %s28
      %p32 = pneg %p26
      %p33 = scmp.eq.s32.totalorder %s17, 1
      %p34 = por %p32, %p33
      %p35 = scmp.ne.s32.totalorder %s27, %s30
      %p36 = scmp.eq.s32.totalorder %s17, 0
      %p37 = por %p35, %p36
      %p38 = scmp.ne.s32.totalorder %s27, %s30
      %p39 = scmp.eq.s32.totalorder %s22, 1
      %p40 = por %p38, %p39
      %p41 = scmp.ne.s32.totalorder %s30, %s31
      %p42 = scmp.eq.s32.totalorder %s22, 0
      %p43 = por %p41, %p42
      %p44 = scmp.ne.s32.totalorder %s30, %s31
      %p45 = scmp.eq.s32.totalorder %s23, 1
      %p46 = por %p44, %p45
      %p48 = scmp.ne.s32.totalorder %s31, %s47
      %p49 = scmp.eq.s32.totalorder %s23, 0
      %p50 = por %p48, %p49
      %s52 = sadd.s32 %s51, 1
      %p55 = scmp.eq.s32.totalorder %s17, 1
      %p56 = scmp.ne.s32.totalorder %s51, %s53
      %p57 = scmp.eq.s32.totalorder %s17, 0
      %p58 = por %p56, %p57
      %p59 = scmp.ne.s32.totalorder %s51, %s53
      %p60 = scmp.eq.s32.totalorder %s22, 1
      %p61 = por %p59, %p60
      %p62 = scmp.ne.s32.totalorder %s53, %s54
      %p63 = scmp.eq.s32.totalorder %s22, 0
      %p64 = por %p62, %p63
      %p65 = scmp.ne.s32.totalorder %s53, %s54
      %p66 = scmp.eq.s32.totalorder %s23, 1
      %p67 = por %p65, %p66
      %p69 = scmp.ne.s32.totalorder %s54, %s68
      %p70 = scmp.eq.s32.totalorder %s23, 0
      %p71 = por %p69, %p70
      %s73 = sadd.s32 %s72, 1
      %p76 = scmp.eq.s32.totalorder %s17, 1
      %p77 = scmp.ne.s32.totalorder %s72, %s74
      %p78 = scmp.eq.s32.totalorder %s17, 0
      %p79 = por %p77, %p78
      %p80 = scmp.ne.s32.totalorder %s72, %s74
      %p81 = scmp.eq.s32.totalorder %s22, 1
      %p82 = por %p80, %p81
      %p83 = scmp.ne.s32.totalorder %s74, %s75
      %p84 = scmp.eq.s32.totalorder %s22, 0
      %p85 = por %p83, %p84
      %p86 = scmp.ne.s32.totalorder %s74, %s75
      %p87 = scmp.eq.s32.totalorder %s23, 1
      %p88 = por %p86, %p87
      %p90 = scmp.ne.s32.totalorder %s75, %s89
      %p91 = scmp.eq.s32.totalorder %s23, 0
      %p92 = por %p90, %p91
      %s94 = sadd.s32 %s93, 1
      %p97 = scmp.eq.s32.totalorder %s17, 1
      %p98 = scmp.ne.s32.totalorder %s93, %s95
      %p99 = scmp.eq.s32.totalorder %s17, 0
      %p100 = por %p98, %p99
      %p101 = scmp.ne.s32.totalorder %s93, %s95
      %p102 = scmp.eq.s32.totalorder %s22, 1
      %p103 = por %p101, %p102
      %p104 = scmp.ne.s32.totalorder %s95, %s96
      %p105 = scmp.eq.s32.totalorder %s22, 0
      %p106 = por %p104, %p105
      %p107 = scmp.ne.s32.totalorder %s95, %s96
      %p108 = scmp.eq.s32.totalorder %s23, 1
      %p109 = por %p107, %p108
      %p111 = scmp.ne.s32.totalorder %s96, %s110
      %p112 = scmp.eq.s32.totalorder %s23, 0
      %p113 = por %p111, %p112
      %s114 = ssub.s32 %s17, %s24
      %p115 = scmp.eq.s32.totalorder %s114, 0
      %s117 = sadd.s32 %s116, 1
      %s118 = scalar_select %p115, %s116, %s117
      %p121 = pneg %p115
      %p122 = scmp.eq.s32.totalorder %s17, 1
      %p123 = por %p121, %p122
      %p124 = scmp.ne.s32.totalorder %s116, %s119
      %p125 = scmp.eq.s32.totalorder %s17, 0
      %p126 = por %p124, %p125
      %p127 = scmp.ne.s32.totalorder %s116, %s119
      %p128 = scmp.eq.s32.totalorder %s22, 1
      %p129 = por %p127, %p128
      %p130 = scmp.ne.s32.totalorder %s119, %s120
      %p131 = scmp.eq.s32.totalorder %s22, 0
      %p132 = por %p130, %p131
      %p133 = scmp.ne.s32.totalorder %s119, %s120
      %p134 = scmp.eq.s32.totalorder %s23, 1
      %p135 = por %p133, %p134
      %p137 = scmp.ne.s32.totalorder %s120, %s136
      %p138 = scmp.eq.s32.totalorder %s23, 0
      %p139 = por %p137, %p138
      %p140 = scmp.le.s32.totalorder 1, %s17
      %p141 = scmp.lt.s32.totalorder %s17, 3
      %p142 = pnand %p140, %p141
      %p143 = pneg %p142
      // Predicated region
      $region9: #{tpu_custom_call.1} parent=5 // pred_check
        _
      $region10: #{tpu_custom_call.1} parent=5 // pred_check_branch
        %145 = sbr.rel (%p142) target = $region12
      $region11: #{tpu_custom_call.1} parent=5 // pred_region
        %s146 = ssub.s32 %s17, 1
        // Predicated region
        $region13: #{tpu_custom_call.1} parent=11 // pred_check
          %p147 = pneg %p64
        $region14: #{tpu_custom_call.1} parent=11 // pred_check_branch
          %149 = sbr.rel (%p147) target = $region16
        $region15: #{tpu_custom_call.1} parent=11 // pred_region
          %s151 = ssub.s32 1024, 1024
          %152 = vsyncadd [#allocation6], %s151
          %s153 = sshll.u32 [#allocation5], 4
          %s154 = int_to_ptr.vmem [resolvable:$true] %s153
          %159 = dma.hbm_to_vmem [thread:$0]  %s1, 1024, %s154, [#allocation6], 64, 64, 4
        $region16: #{tpu_custom_call.1} parent=11 // pred_fallthru
          _
        // Predicated region
        $region17: #{tpu_custom_call.1} parent=11 // pred_check
          %p160 = pneg %p85
        $region18: #{tpu_custom_call.1} parent=11 // pred_check_branch
          %162 = sbr.rel (%p160) target = $region20
        $region19: #{tpu_custom_call.1} parent=11 // pred_region
          _
        $region20: #{tpu_custom_call.1} parent=11 // pred_fallthru
          _
        // Predicated region
        $region21: #{tpu_custom_call.1} parent=11 // pred_check
          %p163 = pneg %p106
        $region22: #{tpu_custom_call.1} parent=11 // pred_check_branch
          %165 = sbr.rel (%p163) target = $region24
        $region23: #{tpu_custom_call.1} parent=11 // pred_region
          _
        $region24: #{tpu_custom_call.1} parent=11 // pred_fallthru
          _
      $region12: #{tpu_custom_call.1} parent=5 // pred_fallthru
        _
      %p166 = scmp.lt.s32.totalorder %s17, 2
      // Predicated region
      $region25: #{tpu_custom_call.1} parent=5 // pred_check
        %p167 = pneg %p166
      $region26: #{tpu_custom_call.1} parent=5 // pred_check_branch
        %169 = sbr.rel (%p167) target = $region28
      $region27: #{tpu_custom_call.1} parent=5 // pred_region
        // Predicated region
        $region29: #{tpu_custom_call.1} parent=27 // pred_check
          %p170 = pneg %p37
        $region30: #{tpu_custom_call.1} parent=27 // pred_check_branch
          %172 = sbr.rel (%p170) target = $region32
        $region31: #{tpu_custom_call.1} parent=27 // pred_region
          %s173 = sand.u32 %s27, 1
          %s174 = scalar_lea.sflag [#allocation3], %s173
          %s175 = sand.u32 %s27, 1
          %s176 = smul.addr %s175, 128
          %s177 = scalar_lea.vmem [#allocation2], %s176
          %s178 = smul.u32 32, %s17
          %s180 = ssub.s32 2048, 2048
          %181 = vsyncadd %s174, %s180
          %s182 = smul.addr %s178, 64
          %s183 = scalar_lea.hbm %s0, %s182
          %s184 = sshll.u32 %s177, 4
          %s185 = int_to_ptr.vmem [resolvable:$true] %s184
          %190 = dma.hbm_to_vmem [thread:$0]  %s183, 2048, %s185, %s174, 64, 64, 4
        $region32: #{tpu_custom_call.1} parent=27 // pred_fallthru
          _
      $region28: #{tpu_custom_call.1} parent=5 // pred_fallthru
        _
      %p191 = scmp.le.s32.totalorder 1, %s17
      %p192 = scmp.lt.s32.totalorder %s17, 3
      %p193 = pnand %p191, %p192
      %p194 = pneg %p193
      // Predicated region
      $region33: #{tpu_custom_call.1} parent=5 // pred_check
        _
      $region34: #{tpu_custom_call.1} parent=5 // pred_check_branch
        %196 = sbr.rel (%p193) target = $region36
      $region35: #{tpu_custom_call.1} parent=5 // pred_region
        %s197 = ssub.s32 %s17, 1
        %s198 = sand.u32 %s30, 1
        %s199 = scalar_lea.sflag [#allocation3], %s198
        %s200 = sand.u32 %s30, 1
        %s201 = smul.addr %s200, 128
        %s202 = scalar_lea.vmem [#allocation2], %s201
        // Predicated region
        $region37: #{tpu_custom_call.1} parent=35 // pred_check
          %p203 = pneg %p43
        $region38: #{tpu_custom_call.1} parent=35 // pred_check_branch
          %205 = sbr.rel (%p203) target = $region40
        $region39: #{tpu_custom_call.1} parent=35 // pred_region
          %206 = dma.done %s199, 2048
        $region40: #{tpu_custom_call.1} parent=35 // pred_fallthru
          _
        // Predicated region
        $region41: #{tpu_custom_call.1} parent=35 // pred_check
          %p207 = pneg %p64
        $region42: #{tpu_custom_call.1} parent=35 // pred_check_branch
          %209 = sbr.rel (%p207) target = $region44
        $region43: #{tpu_custom_call.1} parent=35 // pred_region
          %210 = dma.done [#allocation6], 1024
        $region44: #{tpu_custom_call.1} parent=35 // pred_fallthru
          _
        %s211 = sand.u32 %s30, 1
        %s212 = scalar_lea.sflag [#allocation3], %s211
        %s213 = sand.u32 %s30, 1
        %s214 = smul.addr %s213, 128
        %s215 = scalar_lea.vmem [#allocation2], %s214
        %p216 = pneg %p43
        %p217 = pneg %p40
        %p218 = pneg %p64
        %p219 = pneg %p61
        %p220 = pneg %p85
        %p221 = pneg %p82
        %p222 = pneg %p106
        %p223 = pneg %p103
        %p224 = pneg %p132
        %p225 = pneg %p129
        %s226 = sand.u32 %s119, 1
        %s227 = scalar_lea.sflag [#allocation4], %s226
        %s228 = sand.u32 %s119, 1
        %s229 = smul.addr %s228, 256
        %s230 = scalar_lea.vmem [#allocation7], %s229
        %s231 = smul.u32 32, %s22
        %s232 = smul.u32 32, %s22
        %v234 = vld [vmem:[%s202] sm:$0xf]
        %v235 = vld [vmem:[%s202 + $0x4] sm:$0xf]
        %v236 = vld [vmem:[%s202 + $0x8] sm:$0xf]
        %v237 = vld [vmem:[%s202 + $0xc] sm:$0xf]
        %v238 = vld [vmem:[%s202 + $0x10] sm:$0xf]
        %v239 = vld [vmem:[%s202 + $0x14] sm:$0xf]
        %v240 = vld [vmem:[%s202 + $0x18] sm:$0xf]
        %v241 = vld [vmem:[%s202 + $0x1c] sm:$0xf]
        %v242 = vld [vmem:[%s202 + $0x20] sm:$0xf]
        %v243 = vld [vmem:[%s202 + $0x24] sm:$0xf]
        %v244 = vld [vmem:[%s202 + $0x28] sm:$0xf]
        %v245 = vld [vmem:[%s202 + $0x2c] sm:$0xf]
        %v246 = vld [vmem:[%s202 + $0x30] sm:$0xf]
        %v247 = vld [vmem:[%s202 + $0x34] sm:$0xf]
        %v248 = vld [vmem:[%s202 + $0x38] sm:$0xf]
        %v249 = vld [vmem:[%s202 + $0x3c] sm:$0xf]
        %v250 = vld [vmem:[%s202 + $0x40] sm:$0xf]
        %v251 = vld [vmem:[%s202 + $0x44] sm:$0xf]
        %v252 = vld [vmem:[%s202 + $0x48] sm:$0xf]
        %v253 = vld [vmem:[%s202 + $0x4c] sm:$0xf]
        %v254 = vld [vmem:[%s202 + $0x50] sm:$0xf]
        %v255 = vld [vmem:[%s202 + $0x54] sm:$0xf]
        %v256 = vld [vmem:[%s202 + $0x58] sm:$0xf]
        %v257 = vld [vmem:[%s202 + $0x5c] sm:$0xf]
        %v258 = vld [vmem:[%s202 + $0x60] sm:$0xf]
        %v259 = vld [vmem:[%s202 + $0x64] sm:$0xf]
        %v260 = vld [vmem:[%s202 + $0x68] sm:$0xf]
        %v261 = vld [vmem:[%s202 + $0x6c] sm:$0xf]
        %v262 = vld [vmem:[%s202 + $0x70] sm:$0xf]
        %v263 = vld [vmem:[%s202 + $0x74] sm:$0xf]
        %v264 = vld [vmem:[%s202 + $0x78] sm:$0xf]
        %v265 = vld [vmem:[%s202 + $0x7c] sm:$0xf]
        %v266 = vld [vmem:[#allocation5] sm:$0xf]
        %v267 = vld [vmem:[#allocation5 + $0x4] sm:$0xf]
        %v268 = vld [vmem:[#allocation5 + $0x8] sm:$0xf]
        %v269 = vld [vmem:[#allocation5 + $0xc] sm:$0xf]
        %v270 = vld [vmem:[#allocation5 + $0x10] sm:$0xf]
        %v271 = vld [vmem:[#allocation5 + $0x14] sm:$0xf]
        %v272 = vld [vmem:[#allocation5 + $0x18] sm:$0xf]
        %v273 = vld [vmem:[#allocation5 + $0x1c] sm:$0xf]
        %v274 = vld [vmem:[#allocation5 + $0x20] sm:$0xf]
        %v275 = vld [vmem:[#allocation5 + $0x24] sm:$0xf]
        %v276 = vld [vmem:[#allocation5 + $0x28] sm:$0xf]
        %v277 = vld [vmem:[#allocation5 + $0x2c] sm:$0xf]
        %v278 = vld [vmem:[#allocation5 + $0x30] sm:$0xf]
        %v279 = vld [vmem:[#allocation5 + $0x34] sm:$0xf]
        %v280 = vld [vmem:[#allocation5 + $0x38] sm:$0xf]
        %v281 = vld [vmem:[#allocation5 + $0x3c] sm:$0xf]
        %v314 = vunpack.c.l.b16 %v234
        %v315 = vunpack.c.l.b16 %v235
        %v316 = vunpack.c.l.b16 %v236
        %v317 = vunpack.c.l.b16 %v237
        %v318 = vunpack.c.l.b16 %v238
        %v319 = vunpack.c.l.b16 %v239
        %v320 = vunpack.c.l.b16 %v240
        %v321 = vunpack.c.l.b16 %v241
        %v322 = vunpack.c.l.b16 %v242
        %v323 = vunpack.c.l.b16 %v243
        %v324 = vunpack.c.l.b16 %v244
        %v325 = vunpack.c.l.b16 %v245
        %v326 = vunpack.c.l.b16 %v246
        %v327 = vunpack.c.l.b16 %v247
        %v328 = vunpack.c.l.b16 %v248
        %v329 = vunpack.c.l.b16 %v249
        %v330 = vunpack.c.l.b16 %v250
        %v331 = vunpack.c.l.b16 %v251
        %v332 = vunpack.c.l.b16 %v252
        %v333 = vunpack.c.l.b16 %v253
        %v334 = vunpack.c.l.b16 %v254
        %v335 = vunpack.c.l.b16 %v255
        %v336 = vunpack.c.l.b16 %v256
        %v337 = vunpack.c.l.b16 %v257
        %v338 = vunpack.c.l.b16 %v258
        %v339 = vunpack.c.l.b16 %v259
        %v340 = vunpack.c.l.b16 %v260
        %v341 = vunpack.c.l.b16 %v261
        %v342 = vunpack.c.l.b16 %v262
        %v343 = vunpack.c.l.b16 %v263
        %v344 = vunpack.c.l.b16 %v264
        %v345 = vunpack.c.l.b16 %v265
        %v346 = vpack.c.b16 %v315, %v314
        %v347 = vpack.c.b16 %v317, %v316
        %v348 = vpack.c.b16 %v319, %v318
        %v349 = vpack.c.b16 %v321, %v320
        %v350 = vpack.c.b16 %v323, %v322
        %v351 = vpack.c.b16 %v325, %v324
        %v352 = vpack.c.b16 %v327, %v326
        %v353 = vpack.c.b16 %v329, %v328
        %v354 = vpack.c.b16 %v331, %v330
        %v355 = vpack.c.b16 %v333, %v332
        %v356 = vpack.c.b16 %v335, %v334
        %v357 = vpack.c.b16 %v337, %v336
        %v358 = vpack.c.b16 %v339, %v338
        %v359 = vpack.c.b16 %v341, %v340
        %v360 = vpack.c.b16 %v343, %v342
        %v361 = vpack.c.b16 %v345, %v344
        %v394 = vunpack.c.l.b16 %v266
        %v395 = vunpack.c.l.b16 %v267
        %v396 = vunpack.c.l.b16 %v268
        %v397 = vunpack.c.l.b16 %v269
        %v398 = vunpack.c.l.b16 %v270
        %v399 = vunpack.c.l.b16 %v271
        %v400 = vunpack.c.l.b16 %v272
        %v401 = vunpack.c.l.b16 %v273
        %v402 = vunpack.c.l.b16 %v274
        %v403 = vunpack.c.l.b16 %v275
        %v404 = vunpack.c.l.b16 %v276
        %v405 = vunpack.c.l.b16 %v277
        %v406 = vunpack.c.l.b16 %v278
        %v407 = vunpack.c.l.b16 %v279
        %v408 = vunpack.c.l.b16 %v280
        %v409 = vunpack.c.l.b16 %v281
        %v410 = vpack.c.b16 %v395, %v394
        %v411 = vpack.c.b16 %v397, %v396
        %v412 = vpack.c.b16 %v399, %v398
        %v413 = vpack.c.b16 %v401, %v400
        %v414 = vpack.c.b16 %v403, %v402
        %v415 = vpack.c.b16 %v405, %v404
        %v416 = vpack.c.b16 %v407, %v406
        %v417 = vpack.c.b16 %v409, %v408
        %426 = vmatprep.subr.bf16.mxu0 0
        %427 = vmatpush1.bf16.msra.mxu0 %v410
        %428 = vmatprep.subr.bf16.mxu0 0
        %429 = vmatpush1.bf16.msra.mxu0 %v411
        %430 = vmatprep.subr.bf16.mxu0 0
        %431 = vmatpush1.bf16.msra.mxu0 %v412
        %432 = vmatprep.subr.bf16.mxu0 0
        %433 = vmatpush1.bf16.msra.mxu0 %v413
        %434 = vmatprep.subr.bf16.mxu0 0
        %435 = vmatpush1.bf16.msra.mxu0 %v414
        %436 = vmatprep.subr.bf16.mxu0 0
        %437 = vmatpush1.bf16.msra.mxu0 %v415
        %438 = vmatprep.subr.bf16.mxu0 0
        %439 = vmatpush1.bf16.msra.mxu0 %v416
        %440 = vmatprep.subr.bf16.mxu0 0
        %441 = vmatpush1.bf16.msra.mxu0 %v417
        %442 = vmatprep.subr.bf16.mxu0 0
        %443 = vmatpush1.bf16.msra.mxu0 0
        %444 = vmatprep.subr.bf16.mxu0 0
        %445 = vmatpush1.bf16.msra.mxu0 0
        %446 = vmatprep.subr.bf16.mxu0 0
        %447 = vmatpush1.bf16.msra.mxu0 0
        %448 = vmatprep.subr.bf16.mxu0 0
        %449 = vmatpush1.bf16.msra.mxu0 0
        %450 = vmatprep.subr.bf16.mxu0 0
        %451 = vmatpush1.bf16.msra.mxu0 0
        %452 = vmatprep.subr.bf16.mxu0 0
        %453 = vmatpush1.bf16.msra.mxu0 0
        %454 = vmatprep.subr.bf16.mxu0 0
        %455 = vmatpush1.bf16.msra.mxu0 0
        %456 = vmatprep.subr.bf16.mxu0 0
        %457 = vmatpush1.bf16.msra.mxu0 0
        %458 = vmatprep.mubr.bf16.mxu0 0
        %459 = vmatmul.mubr.bf16.gmra.mrb[0].mxu0 %v346
        %v460 = vpop.f32.mrb[0].mxu0
        %v461 = vadd.f32 0.0, %v460
        %v462 = vpop.f32.mrb[0].mxu0
        %v463 = vpop.f32.mrb[0].mxu0
        %v464 = vadd.f32 0.0, %v463
        %v465 = vpop.f32.mrb[0].mxu0
        %466 = vmatprep.mubr.bf16.mxu0 0
        %467 = vmatmul.mubr.bf16.gmra.mrb[0].mxu0 %v347
        %v468 = vpop.f32.mrb[0].mxu0
        %v469 = vadd.f32 0.0, %v468
        %v470 = vpop.f32.mrb[0].mxu0
        %v471 = vpop.f32.mrb[0].mxu0
        %v472 = vadd.f32 0.0, %v471
        %v473 = vpop.f32.mrb[0].mxu0
        %474 = vmatprep.mubr.bf16.mxu0 0
        %475 = vmatmul.mubr.bf16.gmra.mrb[0].mxu0 %v348
        %v476 = vpop.f32.mrb[0].mxu0
        %v477 = vadd.f32 0.0, %v476
        %v478 = vpop.f32.mrb[0].mxu0
        %v479 = vpop.f32.mrb[0].mxu0
        %v480 = vadd.f32 0.0, %v479
        %v481 = vpop.f32.mrb[0].mxu0
        %482 = vmatprep.mubr.bf16.mxu0 0
        %483 = vmatmul.mubr.bf16.gmra.mrb[0].mxu0 %v349
        %v484 = vpop.f32.mrb[0].mxu0
        %v485 = vadd.f32 0.0, %v484
        %v486 = vpop.f32.mrb[0].mxu0
        %v487 = vpop.f32.mrb[0].mxu0
        %v488 = vadd.f32 0.0, %v487
        %v489 = vpop.f32.mrb[0].mxu0
        %490 = vmatprep.mubr.bf16.mxu0 0
        %491 = vmatmul.mubr.bf16.gmra.mrb[0].mxu0 %v350
        %v492 = vpop.f32.mrb[0].mxu0
        %v493 = vadd.f32 0.0, %v492
        %v494 = vpop.f32.mrb[0].mxu0
        %v495 = vpop.f32.mrb[0].mxu0
        %v496 = vadd.f32 0.0, %v495
        %v497 = vpop.f32.mrb[0].mxu0
        %498 = vmatprep.mubr.bf16.mxu0 0
        %499 = vmatmul.mubr.bf16.gmra.mrb[0].mxu0 %v351
        %v500 = vpop.f32.mrb[0].mxu0
        %v501 = vadd.f32 0.0, %v500
        %v502 = vpop.f32.mrb[0].mxu0
        %v503 = vpop.f32.mrb[0].mxu0
        %v504 = vadd.f32 0.0, %v503
        %v505 = vpop.f32.mrb[0].mxu0
        %506 = vmatprep.mubr.bf16.mxu0 0
        %507 = vmatmul.mubr.bf16.gmra.mrb[0].mxu0 %v352
        %v508 = vpop.f32.mrb[0].mxu0
        %v509 = vadd.f32 0.0, %v508
        %v510 = vpop.f32.mrb[0].mxu0
        %v511 = vpop.f32.mrb[0].mxu0
        %v512 = vadd.f32 0.0, %v511
        %v513 = vpop.f32.mrb[0].mxu0
        %514 = vmatprep.mubr.bf16.mxu0 0
        %515 = vmatmul.mubr.bf16.gmra.mrb[0].mxu0 %v353
        %v516 = vpop.f32.mrb[0].mxu0
        %v517 = vadd.f32 0.0, %v516
        %v518 = vpop.f32.mrb[0].mxu0
        %v519 = vpop.f32.mrb[0].mxu0
        %v520 = vadd.f32 0.0, %v519
        %v521 = vpop.f32.mrb[0].mxu0
        %522 = vmatprep.mubr.bf16.mxu0 0
        %523 = vmatmul.mubr.bf16.gmra.mrb[0].mxu0 %v354
        %v524 = vpop.f32.mrb[0].mxu0
        %v525 = vadd.f32 0.0, %v524
        %v526 = vpop.f32.mrb[0].mxu0
        %v527 = vpop.f32.mrb[0].mxu0
        %v528 = vadd.f32 0.0, %v527
        %v529 = vpop.f32.mrb[0].mxu0
        %530 = vmatprep.mubr.bf16.mxu0 0
        %531 = vmatmul.mubr.bf16.gmra.mrb[0].mxu0 %v355
        %v532 = vpop.f32.mrb[0].mxu0
        %v533 = vadd.f32 0.0, %v532
        %v534 = vpop.f32.mrb[0].mxu0
        %v535 = vpop.f32.mrb[0].mxu0
        %v536 = vadd.f32 0.0, %v535
        %v537 = vpop.f32.mrb[0].mxu0
        %538 = vmatprep.mubr.bf16.mxu0 0
        %539 = vmatmul.mubr.bf16.gmra.mrb[0].mxu0 %v356
        %v540 = vpop.f32.mrb[0].mxu0
        %v541 = vadd.f32 0.0, %v540
        %v542 = vpop.f32.mrb[0].mxu0
        %v543 = vpop.f32.mrb[0].mxu0
        %v544 = vadd.f32 0.0, %v543
        %v545 = vpop.f32.mrb[0].mxu0
        %546 = vmatprep.mubr.bf16.mxu0 0
        %547 = vmatmul.mubr.bf16.gmra.mrb[0].mxu0 %v357
        %v548 = vpop.f32.mrb[0].mxu0
        %v549 = vadd.f32 0.0, %v548
        %v550 = vpop.f32.mrb[0].mxu0
        %v551 = vpop.f32.mrb[0].mxu0
        %v552 = vadd.f32 0.0, %v551
        %v553 = vpop.f32.mrb[0].mxu0
        %554 = vmatprep.mubr.bf16.mxu0 0
        %555 = vmatmul.mubr.bf16.gmra.mrb[0].mxu0 %v358
        %v556 = vpop.f32.mrb[0].mxu0
        %v557 = vadd.f32 0.0, %v556
        %v558 = vpop.f32.mrb[0].mxu0
        %v559 = vpop.f32.mrb[0].mxu0
        %v560 = vadd.f32 0.0, %v559
        %v561 = vpop.f32.mrb[0].mxu0
        %562 = vmatprep.mubr.bf16.mxu0 0
        %563 = vmatmul.mubr.bf16.gmra.mrb[0].mxu0 %v359
        %v564 = vpop.f32.mrb[0].mxu0
        %v565 = vadd.f32 0.0, %v564
        %v566 = vpop.f32.mrb[0].mxu0
        %v567 = vpop.f32.mrb[0].mxu0
        %v568 = vadd.f32 0.0, %v567
        %v569 = vpop.f32.mrb[0].mxu0
        %570 = vmatprep.mubr.bf16.mxu0 0
        %571 = vmatmul.mubr.bf16.gmra.mrb[0].mxu0 %v360
        %v572 = vpop.f32.mrb[0].mxu0
        %v573 = vadd.f32 0.0, %v572
        %v574 = vpop.f32.mrb[0].mxu0
        %v575 = vpop.f32.mrb[0].mxu0
        %v576 = vadd.f32 0.0, %v575
        %v577 = vpop.f32.mrb[0].mxu0
        %578 = vmatprep.mubr.bf16.mxu0 0
        %579 = vmatmul.mubr.bf16.gmra.mrb[0].mxu0 %v361
        %v580 = vpop.f32.mrb[0].mxu0
        %v581 = vadd.f32 0.0, %v580
        %v582 = vpop.f32.mrb[0].mxu0
        %v583 = vpop.f32.mrb[0].mxu0
        %v584 = vadd.f32 0.0, %v583
        %v585 = vpop.f32.mrb[0].mxu0
        %586 = vdwg.mxu0
        %v587 = vld [vmem:[%s2] sm:$0x1]
        %v589 = vlaneseq
        %v590 = vshrl.u32 %v589, 7
        %v591 = vsub.s32 0, %v590
        %v592 = vrot.slane %v587, %v591
        %v594 = vmul.f32 %v461, %v592
        %v595 = vmul.f32 %v464, %v592
        %v596 = vmul.f32 %v469, %v592
        %v597 = vmul.f32 %v472, %v592
        %v598 = vmul.f32 %v477, %v592
        %v599 = vmul.f32 %v480, %v592
        %v600 = vmul.f32 %v485, %v592
        %v601 = vmul.f32 %v488, %v592
        %v602 = vmul.f32 %v493, %v592
        %v603 = vmul.f32 %v496, %v592
        %v604 = vmul.f32 %v501, %v592
        %v605 = vmul.f32 %v504, %v592
        %v606 = vmul.f32 %v509, %v592
        %v607 = vmul.f32 %v512, %v592
        %v608 = vmul.f32 %v517, %v592
        %v609 = vmul.f32 %v520, %v592
        %v610 = vmul.f32 %v525, %v592
        %v611 = vmul.f32 %v528, %v592
        %v612 = vmul.f32 %v533, %v592
        %v613 = vmul.f32 %v536, %v592
        %v614 = vmul.f32 %v541, %v592
        %v615 = vmul.f32 %v544, %v592
        %v616 = vmul.f32 %v549, %v592
        %v617 = vmul.f32 %v552, %v592
        %v618 = vmul.f32 %v557, %v592
        %v619 = vmul.f32 %v560, %v592
        %v620 = vmul.f32 %v565, %v592
        %v621 = vmul.f32 %v568, %v592
        %v622 = vmul.f32 %v573, %v592
        %v623 = vmul.f32 %v576, %v592
        %v624 = vmul.f32 %v581, %v592
        %v625 = vmul.f32 %v584, %v592
        %v626 = vld [vmem:[%s3] sm:$0x1]
        %v628 = vlaneseq
        %v629 = vshrl.u32 %v628, 7
        %v630 = vsub.s32 0, %v629
        %v631 = vrot.slane %v626, %v630
        %v633 = vadd.f32 %v594, %v631
        %v634 = vadd.f32 %v595, %v631
        %v635 = vadd.f32 %v596, %v631
        %v636 = vadd.f32 %v597, %v631
        %v637 = vadd.f32 %v598, %v631
        %v638 = vadd.f32 %v599, %v631
        %v639 = vadd.f32 %v600, %v631
        %v640 = vadd.f32 %v601, %v631
        %v641 = vadd.f32 %v602, %v631
        %v642 = vadd.f32 %v603, %v631
        %v643 = vadd.f32 %v604, %v631
        %v644 = vadd.f32 %v605, %v631
        %v645 = vadd.f32 %v606, %v631
        %v646 = vadd.f32 %v607, %v631
        %v647 = vadd.f32 %v608, %v631
        %v648 = vadd.f32 %v609, %v631
        %v649 = vadd.f32 %v610, %v631
        %v650 = vadd.f32 %v611, %v631
        %v651 = vadd.f32 %v612, %v631
        %v652 = vadd.f32 %v613, %v631
        %v653 = vadd.f32 %v614, %v631
        %v654 = vadd.f32 %v615, %v631
        %v655 = vadd.f32 %v616, %v631
        %v656 = vadd.f32 %v617, %v631
        %v657 = vadd.f32 %v618, %v631
        %v658 = vadd.f32 %v619, %v631
        %v659 = vadd.f32 %v620, %v631
        %v660 = vadd.f32 %v621, %v631
        %v661 = vadd.f32 %v622, %v631
        %v662 = vadd.f32 %v623, %v631
        %v663 = vadd.f32 %v624, %v631
        %v664 = vadd.f32 %v625, %v631
        %v665 = vmax.f32 %v633, 0.0
        %v666 = vmax.f32 %v634, 0.0
        %v667 = vmax.f32 %v635, 0.0
        %v668 = vmax.f32 %v636, 0.0
        %v669 = vmax.f32 %v637, 0.0
        %v670 = vmax.f32 %v638, 0.0
        %v671 = vmax.f32 %v639, 0.0
        %v672 = vmax.f32 %v640, 0.0
        %v673 = vmax.f32 %v641, 0.0
        %v674 = vmax.f32 %v642, 0.0
        %v675 = vmax.f32 %v643, 0.0
        %v676 = vmax.f32 %v644, 0.0
        %v677 = vmax.f32 %v645, 0.0
        %v678 = vmax.f32 %v646, 0.0
        %v679 = vmax.f32 %v647, 0.0
        %v680 = vmax.f32 %v648, 0.0
        %v681 = vmax.f32 %v649, 0.0
        %v682 = vmax.f32 %v650, 0.0
        %v683 = vmax.f32 %v651, 0.0
        %v684 = vmax.f32 %v652, 0.0
        %v685 = vmax.f32 %v653, 0.0
        %v686 = vmax.f32 %v654, 0.0
        %v687 = vmax.f32 %v655, 0.0
        %v688 = vmax.f32 %v656, 0.0
        %v689 = vmax.f32 %v657, 0.0
        %v690 = vmax.f32 %v658, 0.0
        %v691 = vmax.f32 %v659, 0.0
        %v692 = vmax.f32 %v660, 0.0
        %v693 = vmax.f32 %v661, 0.0
        %v694 = vmax.f32 %v662, 0.0
        %v695 = vmax.f32 %v663, 0.0
        %v696 = vmax.f32 %v664, 0.0
        %697 = vst [vmem:[%s230] sm:$0xff] %v665
        %698 = vst [vmem:[%s230 + $0x8] sm:$0xff] %v666
        %699 = vst [vmem:[%s230 + $0x10] sm:$0xff] %v667
        %700 = vst [vmem:[%s230 + $0x18] sm:$0xff] %v668
        %701 = vst [vmem:[%s230 + $0x20] sm:$0xff] %v669
        %702 = vst [vmem:[%s230 + $0x28] sm:$0xff] %v670
        %703 = vst [vmem:[%s230 + $0x30] sm:$0xff] %v671
        %704 = vst [vmem:[%s230 + $0x38] sm:$0xff] %v672
        %705 = vst [vmem:[%s230 + $0x40] sm:$0xff] %v673
        %706 = vst [vmem:[%s230 + $0x48] sm:$0xff] %v674
        %707 = vst [vmem:[%s230 + $0x50] sm:$0xff] %v675
        %708 = vst [vmem:[%s230 + $0x58] sm:$0xff] %v676
        %709 = vst [vmem:[%s230 + $0x60] sm:$0xff] %v677
        %710 = vst [vmem:[%s230 + $0x68] sm:$0xff] %v678
        %711 = vst [vmem:[%s230 + $0x70] sm:$0xff] %v679
        %712 = vst [vmem:[%s230 + $0x78] sm:$0xff] %v680
        %713 = vst [vmem:[%s230 + $0x80] sm:$0xff] %v681
        %714 = vst [vmem:[%s230 + $0x88] sm:$0xff] %v682
        %715 = vst [vmem:[%s230 + $0x90] sm:$0xff] %v683
        %716 = vst [vmem:[%s230 + $0x98] sm:$0xff] %v684
        %717 = vst [vmem:[%s230 + $0xa0] sm:$0xff] %v685
        %718 = vst [vmem:[%s230 + $0xa8] sm:$0xff] %v686
        %719 = vst [vmem:[%s230 + $0xb0] sm:$0xff] %v687
        %720 = vst [vmem:[%s230 + $0xb8] sm:$0xff] %v688
        %721 = vst [vmem:[%s230 + $0xc0] sm:$0xff] %v689
        %722 = vst [vmem:[%s230 + $0xc8] sm:$0xff] %v690
        %723 = vst [vmem:[%s230 + $0xd0] sm:$0xff] %v691
        %724 = vst [vmem:[%s230 + $0xd8] sm:$0xff] %v692
        %725 = vst [vmem:[%s230 + $0xe0] sm:$0xff] %v693
        %726 = vst [vmem:[%s230 + $0xe8] sm:$0xff] %v694
        %727 = vst [vmem:[%s230 + $0xf0] sm:$0xff] %v695
        %728 = vst [vmem:[%s230 + $0xf8] sm:$0xff] %v696
        %s729 = sand.u32 %s119, 1
        %s730 = scalar_lea.sflag [#allocation4], %s729
        %s731 = sand.u32 %s119, 1
        %s732 = smul.addr %s731, 256
        %s733 = scalar_lea.vmem [#allocation7], %s732
        // Predicated region
        $region45: #{tpu_custom_call.1} parent=35 // pred_check
          %p734 = pneg %p129
        $region46: #{tpu_custom_call.1} parent=35 // pred_check_branch
          %736 = sbr.rel (%p734) target = $region48
        $region47: #{tpu_custom_call.1} parent=35 // pred_region
          %s737 = smul.u32 32, %s22
          %s739 = ssub.s32 4096, 4096
          %740 = vsyncadd %s730, %s739
          %s741 = smul.addr %s737, 128
          %s742 = scalar_lea.hbm %s4, %s741
          %s743 = sshll.u32 %s733, 4
          %s744 = int_to_ptr.vmem [resolvable:$true] %s743
          %749 = dma.vmem_to_hbm [thread:$0]  %s744, 4096, %s742, %s730, 128, 128, 8
        $region48: #{tpu_custom_call.1} parent=35 // pred_fallthru
          _
      $region36: #{tpu_custom_call.1} parent=5 // pred_fallthru
        _
      %p750 = scmp.le.s32.totalorder 2, %s17
      // Predicated region
      $region49: #{tpu_custom_call.1} parent=5 // pred_check
        %p751 = pneg %p750
      $region50: #{tpu_custom_call.1} parent=5 // pred_check_branch
        %753 = sbr.rel (%p751) target = $region52
      $region51: #{tpu_custom_call.1} parent=5 // pred_region
        %s754 = ssub.s32 %s17, 2
        // Predicated region
        $region53: #{tpu_custom_call.1} parent=51 // pred_check
          %p755 = pneg %p135
        $region54: #{tpu_custom_call.1} parent=51 // pred_check_branch
          %757 = sbr.rel (%p755) target = $region56
        $region55: #{tpu_custom_call.1} parent=51 // pred_region
          %s758 = sand.u32 %s120, 1
          %s759 = scalar_lea.sflag [#allocation4], %s758
          %s760 = sand.u32 %s120, 1
          %s761 = smul.addr %s760, 256
          %s762 = scalar_lea.vmem [#allocation7], %s761
          %763 = dma.done %s759, 4096
        $region56: #{tpu_custom_call.1} parent=51 // pred_fallthru
          _
      $region52: #{tpu_custom_call.1} parent=5 // pred_fallthru
        _
    $region6: #{tpu_custom_call.1} parent=1 // loop_footer
      %s21 = sadd.s32 1, %s17
    $region7: #{tpu_custom_call.1} parent=1 // loop_footer_branch
      %16 = sbr.rel target = $region3
    $region8: #{tpu_custom_call.1} parent=1 // loop_exit
      _
    %764 = vsyncpa [#allocation3], 1
    %s765 = scalar_lea.sflag [#allocation3], 1
    %766 = vsyncpa %s765, 1
    %767 = vsyncpa [#allocation6], 1
    %768 = vsyncpa [#allocation4], 1
    %s769 = scalar_lea.sflag [#allocation4], 1
    %770 = vsyncpa %s769, 1

</llo_original>
